<compile_context>
chip_gen: v5e
topology: v5e:2x2
jax: 0.10.0
libtpu: 0.0.40
codegen_flags: <defaults>
</compile_context>

<pallas_src>
import jax
import jax.numpy as jnp
from jax import lax
from jax.experimental import pallas as pl
from jax.experimental.pallas import tpu as pltpu


def _nearest_upsample_kernel(x_ref, e_ref, o_ref):
    # (block_rows, W) @ (W, sh*W*sw) -> (block_rows, sh*W*sw), lane-dense store.
    # E is a 0/1 selection matrix, so with HIGHEST precision the result is a
    # bit-exact replication of the input values.
    o_ref[...] = jnp.dot(
        x_ref[...], e_ref[...],
        preferred_element_type=jnp.float32,
        precision=lax.Precision.HIGHEST,
    ).astype(o_ref.dtype)


def interpolate_nearest(x, scale_factor):
    """Pallas TPU equivalent of F.interpolate(x, scale_factor=s, mode='nearest')
    for NCHW input and positive integer scale factor(s)."""
    if isinstance(scale_factor, (tuple, list)):
        sh, sw = int(scale_factor[0]), int(scale_factor[1])
    else:
        sh = sw = int(scale_factor)
    assert sh >= 1 and sw >= 1
    # TODO(synk): non-integer scale factors and modes other than 'nearest'
    # (e.g. bilinear) are not implemented by this kernel.

    N, C, H, W = x.shape
    rows = N * C * H
    cols_out = sh * W * sw
    itemsize = jnp.dtype(x.dtype).itemsize

    # Free (no-copy) view: one row per input image row.
    x2 = x.reshape(rows, W)

    # Constant 0/1 expansion matrix: column (i*W*sw + w*sw + j) selects lane w.
    src_of_col = jnp.tile(jnp.repeat(jnp.arange(W), sw), sh)          # (cols_out,)
    e = (src_of_col[None, :] == jnp.arange(W)[:, None]).astype(x.dtype)

    # Row tiling: largest block (multiple of 8 sublanes) whose in+out block
    # stays within a per-buffer VMEM budget; small inputs run in one block.
    budget = 8 << 20
    per_row_bytes = (W + cols_out) * itemsize
    block_rows = min(rows, max(8, (budget // max(per_row_bytes, 1)) // 8 * 8))
    if block_rows >= rows:
        block_rows = rows
    grid = (pl.cdiv(rows, block_rows),)

    # Explicit scoped-VMEM limit: double-buffered in/out blocks + constant E
    # (+ headroom), clamped to stay safe on v7x's smaller physical VMEM.
    vmem_need = (2 * block_rows * (W + cols_out) + 2 * W * cols_out) * itemsize
    vmem_limit = int(min(max(vmem_need + (8 << 20), 32 << 20), 96 << 20))

    out2 = pl.pallas_call(
        _nearest_upsample_kernel,
        out_shape=jax.ShapeDtypeStruct((rows, cols_out), x.dtype),
        grid=grid,
        in_specs=[
            pl.BlockSpec((block_rows, W), lambda r: (r, 0)),
            pl.BlockSpec((W, cols_out), lambda r: (0, 0)),
        ],
        out_specs=pl.BlockSpec((block_rows, cols_out), lambda r: (r, 0)),
        compiler_params=pltpu.CompilerParams(
            dimension_semantics=("parallel",),
            vmem_limit_bytes=vmem_limit,
        ),
    )(x2, e)

    # Free (no-copy) reshape back to NCHW:
    #   (N*C*H, sh*W*sw) row-major == (N, C, H*sh, W*sw) row-major.
    return out2.reshape(N, C, H * sh, W * sw)


if __name__ == "__main__":
    key = jax.random.PRNGKey(0)
    N, C, H, W = 2, 4, 16, 16
    scale = 2
    x = jax.random.normal(key, (N, C, H, W), jnp.float32)

    out = interpolate_nearest(x, scale)
    jax.block_until_ready(out)

    # Pure-JAX reference for nearest upsampling with an integer scale factor
    # (matches PyTorch F.interpolate(mode='nearest', scale_factor=scale)).
    ref = jnp.repeat(jnp.repeat(x, scale, axis=2), scale, axis=3)

    assert out.shape == (N, C, H * scale, W * scale), out.shape
    assert jnp.allclose(out, ref, atol=1e-6, rtol=1e-6), \
        float(jnp.max(jnp.abs(out - ref)))
    print("KERNEL_OK")
</pallas_src>

<mosaic_0001>
module attributes {stable_mosaic.version = 11 : i64} {
  func.func @_nearest_upsample_kernel(%arg0: i32, %arg1: memref<128x16xf32, #tpu.memory_space<vmem>>, %arg2: memref<16x64xf32, #tpu.memory_space<vmem>>, %arg3: memref<128x64xf32, #tpu.memory_space<vmem>>) attributes {dimension_semantics = [#tpu.dimension_semantics<parallel>], iteration_bounds = array<i64: 1>, scalar_prefetch = 0 : i64, scratch_operands = 0 : i64, tpu.core_type = #tpu.core_type<tc>, window_params = [{transform_indices = @transform_0, window_bounds = array<i64: 128, 16>}, {pipeline_mode = #tpu.pipeline_mode<synchronous>, transform_indices = @transform_1, window_bounds = array<i64: 16, 64>}, {transform_indices = @transform_2, window_bounds = array<i64: 128, 64>}]} {
    %c0 = arith.constant 0 : index
    %c0_0 = arith.constant 0 : index
    %0 = vector.load %arg1[%c0, %c0_0] : memref<128x16xf32, #tpu.memory_space<vmem>>, vector<128x16xf32>
    %c0_1 = arith.constant 0 : index
    %c0_2 = arith.constant 0 : index
    %1 = vector.load %arg2[%c0_1, %c0_2] : memref<16x64xf32, #tpu.memory_space<vmem>>, vector<16x64xf32>
    %cst = arith.constant dense<0.000000e+00> : vector<128x64xf32>
    %2 = tpu.matmul %0, %1, %cst {dimension_numbers = #tpu.dot_dimension_numbers<[1], [0], [0], [1], [0, 0, 1, 1], [], []>, precision = #tpu.contract_precision<fp32>} : vector<128x16xf32>, vector<16x64xf32>, vector<128x64xf32> -> vector<128x64xf32>
    %c0_3 = arith.constant 0 : index
    %c0_4 = arith.constant 0 : index
    %3 = vector.load %arg3[%c0_3, %c0_4] : memref<128x64xf32, #tpu.memory_space<vmem>>, vector<128x64xf32>
    tpu.vector_store %arg3[%c0_3, %c0_4], %2 {strides = array<i32>} : memref<128x64xf32, #tpu.memory_space<vmem>>, vector<128x64xf32>,
    return
  }
  func.func @transform_0(%arg0: i32) -> (i32, i32) {
    %c0_i32 = arith.constant 0 : i32
    %c0_i32_0 = arith.constant 0 : i32
    return %arg0, %c0_i32 : i32, i32
  }
  func.func @transform_1(%arg0: i32) -> (i32, i32) {
    %c0_i32 = arith.constant 0 : i32
    %c0_i32_0 = arith.constant 0 : i32
    %c0_i32_1 = arith.constant 0 : i32
    return %c0_i32, %c0_i32_0 : i32, i32
  }
  func.func @transform_2(%arg0: i32) -> (i32, i32) {
    %c0_i32 = arith.constant 0 : i32
    %c0_i32_0 = arith.constant 0 : i32
    return %arg0, %c0_i32 : i32, i32
  }
}

</mosaic_0001>

<llo_original>
// kernel: tpu_custom_call.1
$region0: #{tpu_custom_call.1}
  #allocation0 [shape = 'u32[]', space=smem, size = 0x4, offset = 0x4, fixed_abs, tag = 'smem constant byte address 0x4 - core index']
  #allocation1 [shape = 'u32[72,128]{1,0:T(1,128)}', space=vmem, size = 0x9000, scoped, tag = 'internal scratch']
  %s0 = inlined_call_operand.vmem [shape: f32[128,16], index: 0, kind: input, shape index: {}]
  %s1 = inlined_call_operand.vmem [shape: f32[16,64], index: 1, kind: input, shape index: {}]
  %s2 = inlined_call_operand.vmem [shape: f32[128,64], index: 2, kind: output, shape index: {}]
  %s3 = sld [smem:[#allocation0]]
  $region18: #{tpu_custom_call.1} parent=0
    _
  %s5 = ssub.s32 1, %s3
  %s6 = scalar_select 0, %s5, %s3
  // Predicated region
  $region2: #{tpu_custom_call.1} parent=0 // pred_check
    _
  $region3: #{tpu_custom_call.1} parent=0 // pred_check_branch
    %8 = sbr.rel (0) target = $region5
  $region4: #{tpu_custom_call.1} parent=0 // pred_region
    _
  $region5: #{tpu_custom_call.1} parent=0 // pred_fallthru
    _
  // Predicated region
  $region6: #{tpu_custom_call.1} parent=0 // pred_check
    _
  $region7: #{tpu_custom_call.1} parent=0 // pred_check_branch
    %10 = sbr.rel (0) target = $region9
  $region8: #{tpu_custom_call.1} parent=0 // pred_region
    _
  $region9: #{tpu_custom_call.1} parent=0 // pred_fallthru
    _
  %v11 = vld [vmem:[%s0] sm:$0xff]
  %v12 = vld [vmem:[%s0 + $0x8] sm:$0xff]
  %v13 = vld [vmem:[%s0 + $0x10] sm:$0xff]
  %v14 = vld [vmem:[%s0 + $0x18] sm:$0xff]
  %v15 = vld [vmem:[%s0 + $0x20] sm:$0xff]
  %v16 = vld [vmem:[%s0 + $0x28] sm:$0xff]
  %v17 = vld [vmem:[%s0 + $0x30] sm:$0xff]
  %v18 = vld [vmem:[%s0 + $0x38] sm:$0xff]
  %v19 = vld [vmem:[%s0 + $0x40] sm:$0xff]
  %v20 = vld [vmem:[%s0 + $0x48] sm:$0xff]
  %v21 = vld [vmem:[%s0 + $0x50] sm:$0xff]
  %v22 = vld [vmem:[%s0 + $0x58] sm:$0xff]
  %v23 = vld [vmem:[%s0 + $0x60] sm:$0xff]
  %v24 = vld [vmem:[%s0 + $0x68] sm:$0xff]
  %v25 = vld [vmem:[%s0 + $0x70] sm:$0xff]
  %v26 = vld [vmem:[%s0 + $0x78] sm:$0xff]
  %v27 = vld [vmem:[%s1] sm:$0xff]
  %v28 = vld [vmem:[%s1 + $0x8] sm:$0xff]
  %vm29 = vcmask 130048
  %v31 = vsel %vm29, %v11, 0
  %v34 = vsel %vm29, %v12, 0
  %v37 = vsel %vm29, %v13, 0
  %v40 = vsel %vm29, %v14, 0
  %v43 = vsel %vm29, %v15, 0
  %v46 = vsel %vm29, %v16, 0
  %v49 = vsel %vm29, %v17, 0
  %v52 = vsel %vm29, %v18, 0
  %v55 = vsel %vm29, %v19, 0
  %v58 = vsel %vm29, %v20, 0
  %v61 = vsel %vm29, %v21, 0
  %v64 = vsel %vm29, %v22, 0
  %v67 = vsel %vm29, %v23, 0
  %v70 = vsel %vm29, %v24, 0
  %v73 = vsel %vm29, %v25, 0
  %v76 = vsel %vm29, %v26, 0
  %78 = vmatpush.msra.mxu0 0.0
  %79 = vmatpush.msra.mxu0 0.0
  %80 = vmatpush.msra.mxu0 0.0
  %81 = vmatpush.msra.mxu0 0.0
  %82 = vmatpush.msra.mxu0 0.0
  %83 = vmatpush.msra.mxu0 0.0
  %84 = vmatpush.msra.mxu0 0.0
  %85 = vmatpush.msra.mxu0 0.0
  %86 = vmatpush.msra.mxu0 0.0
  %87 = vmatpush.msra.mxu0 0.0
  %88 = vmatpush.msra.mxu0 0.0
  %89 = vmatpush.msra.mxu0 0.0
  %90 = vmatpush.msra.mxu0 0.0
  %91 = vmatpush.msra.mxu0 0.0
  %v92 = vand.u32 %v28, 4294901760
  %93 = vmatpush.msra.mxu0 %v92
  %v94 = vand.u32 %v27, 4294901760
  %95 = vmatpush.msra.mxu0 %v94
  %v96 = vand.u32 %v31, 4294901760
  %v97 = vsub.f32 %v31, %v96
  %v98 = vand.u32 %v97, 4294901760
  %v99 = vsub.f32 %v97, %v98
  %v100 = vand.u32 %v99, 4294901760
  %101 = vmatmul.f32.gmra.mxu0 %v100
  %v102 = vpop.f32.mrf.mxu0
  %v103 = vadd.f32 0.0, %v102
  %v104 = vand.u32 %v34, 4294901760
  %v105 = vsub.f32 %v34, %v104
  %v106 = vand.u32 %v105, 4294901760
  %v107 = vsub.f32 %v105, %v106
  %v108 = vand.u32 %v107, 4294901760
  %109 = vmatmul.f32.gmra.mxu0 %v108
  %v110 = vpop.f32.mrf.mxu0
  %v111 = vadd.f32 0.0, %v110
  %v112 = vand.u32 %v37, 4294901760
  %v113 = vsub.f32 %v37, %v112
  %v114 = vand.u32 %v113, 4294901760
  %v115 = vsub.f32 %v113, %v114
  %v116 = vand.u32 %v115, 4294901760
  %117 = vmatmul.f32.gmra.mxu0 %v116
  %v118 = vpop.f32.mrf.mxu0
  %v119 = vadd.f32 0.0, %v118
  %v120 = vand.u32 %v40, 4294901760
  %v121 = vsub.f32 %v40, %v120
  %v122 = vand.u32 %v121, 4294901760
  %v123 = vsub.f32 %v121, %v122
  %v124 = vand.u32 %v123, 4294901760
  %125 = vmatmul.f32.gmra.mxu0 %v124
  %v126 = vpop.f32.mrf.mxu0
  %v127 = vadd.f32 0.0, %v126
  %v128 = vand.u32 %v43, 4294901760
  %v129 = vsub.f32 %v43, %v128
  %v130 = vand.u32 %v129, 4294901760
  %v131 = vsub.f32 %v129, %v130
  %v132 = vand.u32 %v131, 4294901760
  %133 = vmatmul.f32.gmra.mxu0 %v132
  %v134 = vpop.f32.mrf.mxu0
  %v135 = vadd.f32 0.0, %v134
  %v136 = vand.u32 %v46, 4294901760
  %v137 = vsub.f32 %v46, %v136
  %v138 = vand.u32 %v137, 4294901760
  %v139 = vsub.f32 %v137, %v138
  %v140 = vand.u32 %v139, 4294901760
  %141 = vmatmul.f32.gmra.mxu0 %v140
  %v142 = vpop.f32.mrf.mxu0
  %v143 = vadd.f32 0.0, %v142
  %v144 = vand.u32 %v49, 4294901760
  %v145 = vsub.f32 %v49, %v144
  %v146 = vand.u32 %v145, 4294901760
  %v147 = vsub.f32 %v145, %v146
  %v148 = vand.u32 %v147, 4294901760
  %149 = vmatmul.f32.gmra.mxu0 %v148
  %v150 = vpop.f32.mrf.mxu0
  %v151 = vadd.f32 0.0, %v150
  %v152 = vand.u32 %v52, 4294901760
  %v153 = vsub.f32 %v52, %v152
  %v154 = vand.u32 %v153, 4294901760
  %v155 = vsub.f32 %v153, %v154
  %v156 = vand.u32 %v155, 4294901760
  %157 = vmatmul.f32.gmra.mxu0 %v156
  %v158 = vpop.f32.mrf.mxu0
  %v159 = vadd.f32 0.0, %v158
  %v160 = vand.u32 %v55, 4294901760
  %v161 = vsub.f32 %v55, %v160
  %v162 = vand.u32 %v161, 4294901760
  %v163 = vsub.f32 %v161, %v162
  %v164 = vand.u32 %v163, 4294901760
  %165 = vmatmul.f32.gmra.mxu0 %v164
  %v166 = vpop.f32.mrf.mxu0
  %v167 = vadd.f32 0.0, %v166
  %v168 = vand.u32 %v58, 4294901760
  %v169 = vsub.f32 %v58, %v168
  %v170 = vand.u32 %v169, 4294901760
  %v171 = vsub.f32 %v169, %v170
  %v172 = vand.u32 %v171, 4294901760
  %173 = vmatmul.f32.gmra.mxu0 %v172
  %v174 = vpop.f32.mrf.mxu0
  %v175 = vadd.f32 0.0, %v174
  %v176 = vand.u32 %v61, 4294901760
  %v177 = vsub.f32 %v61, %v176
  %v178 = vand.u32 %v177, 4294901760
  %v179 = vsub.f32 %v177, %v178
  %v180 = vand.u32 %v179, 4294901760
  %181 = vmatmul.f32.gmra.mxu0 %v180
  %v182 = vpop.f32.mrf.mxu0
  %v183 = vadd.f32 0.0, %v182
  %v184 = vand.u32 %v64, 4294901760
  %v185 = vsub.f32 %v64, %v184
  %v186 = vand.u32 %v185, 4294901760
  %v187 = vsub.f32 %v185, %v186
  %v188 = vand.u32 %v187, 4294901760
  %189 = vmatmul.f32.gmra.mxu0 %v188
  %v190 = vpop.f32.mrf.mxu0
  %v191 = vadd.f32 0.0, %v190
  %v192 = vand.u32 %v67, 4294901760
  %v193 = vsub.f32 %v67, %v192
  %v194 = vand.u32 %v193, 4294901760
  %v195 = vsub.f32 %v193, %v194
  %v196 = vand.u32 %v195, 4294901760
  %197 = vmatmul.f32.gmra.mxu0 %v196
  %v198 = vpop.f32.mrf.mxu0
  %v199 = vadd.f32 0.0, %v198
  %v200 = vand.u32 %v70, 4294901760
  %v201 = vsub.f32 %v70, %v200
  %v202 = vand.u32 %v201, 4294901760
  %v203 = vsub.f32 %v201, %v202
  %v204 = vand.u32 %v203, 4294901760
  %205 = vmatmul.f32.gmra.mxu0 %v204
  %v206 = vpop.f32.mrf.mxu0
  %v207 = vadd.f32 0.0, %v206
  %v208 = vand.u32 %v73, 4294901760
  %v209 = vsub.f32 %v73, %v208
  %v210 = vand.u32 %v209, 4294901760
  %v211 = vsub.f32 %v209, %v210
  %v212 = vand.u32 %v211, 4294901760
  %213 = vmatmul.f32.gmra.mxu0 %v212
  %v214 = vpop.f32.mrf.mxu0
  %v215 = vadd.f32 0.0, %v214
  %v216 = vand.u32 %v76, 4294901760
  %v217 = vsub.f32 %v76, %v216
  %v218 = vand.u32 %v217, 4294901760
  %v219 = vsub.f32 %v217, %v218
  %v220 = vand.u32 %v219, 4294901760
  %221 = vmatmul.f32.gmra.mxu0 %v220
  %v222 = vpop.f32.mrf.mxu0
  %v223 = vadd.f32 0.0, %v222
  %224 = vdwg.mxu0
  %225 = vmatpush.msra.mxu0 0.0
  %226 = vmatpush.msra.mxu0 0.0
  %227 = vmatpush.msra.mxu0 0.0
  %228 = vmatpush.msra.mxu0 0.0
  %229 = vmatpush.msra.mxu0 0.0
  %230 = vmatpush.msra.mxu0 0.0
  %231 = vmatpush.msra.mxu0 0.0
  %232 = vmatpush.msra.mxu0 0.0
  %233 = vmatpush.msra.mxu0 0.0
  %234 = vmatpush.msra.mxu0 0.0
  %235 = vmatpush.msra.mxu0 0.0
  %236 = vmatpush.msra.mxu0 0.0
  %237 = vmatpush.msra.mxu0 0.0
  %238 = vmatpush.msra.mxu0 0.0
  %v239 = vand.u32 %v28, 4294901760
  %v240 = vsub.f32 %v28, %v239
  %v241 = vand.u32 %v240, 4294901760
  %v242 = vsub.f32 %v240, %v241
  %v243 = vand.u32 %v242, 4294901760
  %244 = vmatpush.msra.mxu0 %v243
  %v245 = vand.u32 %v27, 4294901760
  %v246 = vsub.f32 %v27, %v245
  %v247 = vand.u32 %v246, 4294901760
  %v248 = vsub.f32 %v246, %v247
  %v249 = vand.u32 %v248, 4294901760
  %250 = vmatpush.msra.mxu0 %v249
  %v251 = vand.u32 %v31, 4294901760
  %252 = vmatmul.f32.gmra.mxu0 %v251
  %v253 = vpop.f32.mrf.mxu0
  %v254 = vadd.f32 %v103, %v253
  %v255 = vand.u32 %v34, 4294901760
  %256 = vmatmul.f32.gmra.mxu0 %v255
  %v257 = vpop.f32.mrf.mxu0
  %v258 = vadd.f32 %v111, %v257
  %v259 = vand.u32 %v37, 4294901760
  %260 = vmatmul.f32.gmra.mxu0 %v259
  %v261 = vpop.f32.mrf.mxu0
  %v262 = vadd.f32 %v119, %v261
  %v263 = vand.u32 %v40, 4294901760
  %264 = vmatmul.f32.gmra.mxu0 %v263
  %v265 = vpop.f32.mrf.mxu0
  %v266 = vadd.f32 %v127, %v265
  %v267 = vand.u32 %v43, 4294901760
  %268 = vmatmul.f32.gmra.mxu0 %v267
  %v269 = vpop.f32.mrf.mxu0
  %v270 = vadd.f32 %v135, %v269
  %v271 = vand.u32 %v46, 4294901760
  %272 = vmatmul.f32.gmra.mxu0 %v271
  %v273 = vpop.f32.mrf.mxu0
  %v274 = vadd.f32 %v143, %v273
  %v275 = vand.u32 %v49, 4294901760
  %276 = vmatmul.f32.gmra.mxu0 %v275
  %v277 = vpop.f32.mrf.mxu0
  %v278 = vadd.f32 %v151, %v277
  %v279 = vand.u32 %v52, 4294901760
  %280 = vmatmul.f32.gmra.mxu0 %v279
  %v281 = vpop.f32.mrf.mxu0
  %v282 = vadd.f32 %v159, %v281
  %v283 = vand.u32 %v55, 4294901760
  %284 = vmatmul.f32.gmra.mxu0 %v283
  %v285 = vpop.f32.mrf.mxu0
  %v286 = vadd.f32 %v167, %v285
  %v287 = vand.u32 %v58, 4294901760
  %288 = vmatmul.f32.gmra.mxu0 %v287
  %v289 = vpop.f32.mrf.mxu0
  %v290 = vadd.f32 %v175, %v289
  %v291 = vand.u32 %v61, 4294901760
  %292 = vmatmul.f32.gmra.mxu0 %v291
  %v293 = vpop.f32.mrf.mxu0
  %v294 = vadd.f32 %v183, %v293
  %v295 = vand.u32 %v64, 4294901760
  %296 = vmatmul.f32.gmra.mxu0 %v295
  %v297 = vpop.f32.mrf.mxu0
  %v298 = vadd.f32 %v191, %v297
  %v299 = vand.u32 %v67, 4294901760
  %300 = vmatmul.f32.gmra.mxu0 %v299
  %v301 = vpop.f32.mrf.mxu0
  %v302 = vadd.f32 %v199, %v301
  %v303 = vand.u32 %v70, 4294901760
  %304 = vmatmul.f32.gmra.mxu0 %v303
  %v305 = vpop.f32.mrf.mxu0
  %v306 = vadd.f32 %v207, %v305
  %v307 = vand.u32 %v73, 4294901760
  %308 = vmatmul.f32.gmra.mxu0 %v307
  %v309 = vpop.f32.mrf.mxu0
  %v310 = vadd.f32 %v215, %v309
  %v311 = vand.u32 %v76, 4294901760
  %312 = vmatmul.f32.gmra.mxu0 %v311
  %v313 = vpop.f32.mrf.mxu0
  %v314 = vadd.f32 %v223, %v313
  %315 = vdwg.mxu0
  %316 = vmatpush.msra.mxu0 0.0
  %317 = vmatpush.msra.mxu0 0.0
  %318 = vmatpush.msra.mxu0 0.0
  %319 = vmatpush.msra.mxu0 0.0
  %320 = vmatpush.msra.mxu0 0.0
  %321 = vmatpush.msra.mxu0 0.0
  %322 = vmatpush.msra.mxu0 0.0
  %323 = vmatpush.msra.mxu0 0.0
  %324 = vmatpush.msra.mxu0 0.0
  %325 = vmatpush.msra.mxu0 0.0
  %326 = vmatpush.msra.mxu0 0.0
  %327 = vmatpush.msra.mxu0 0.0
  %328 = vmatpush.msra.mxu0 0.0
  %329 = vmatpush.msra.mxu0 0.0
  %v330 = vand.u32 %v28, 4294901760
  %v331 = vsub.f32 %v28, %v330
  %332 = vmatpush.msra.mxu0 %v331
  %v333 = vand.u32 %v27, 4294901760
  %v334 = vsub.f32 %v27, %v333
  %335 = vmatpush.msra.mxu0 %v334
  %v336 = vand.u32 %v31, 4294901760
  %v337 = vsub.f32 %v31, %v336
  %338 = vmatmul.f32.gmra.mxu0 %v337
  %v339 = vpop.f32.mrf.mxu0
  %v340 = vadd.f32 %v254, %v339
  %v341 = vand.u32 %v34, 4294901760
  %v342 = vsub.f32 %v34, %v341
  %343 = vmatmul.f32.gmra.mxu0 %v342
  %v344 = vpop.f32.mrf.mxu0
  %v345 = vadd.f32 %v258, %v344
  %v346 = vand.u32 %v37, 4294901760
  %v347 = vsub.f32 %v37, %v346
  %348 = vmatmul.f32.gmra.mxu0 %v347
  %v349 = vpop.f32.mrf.mxu0
  %v350 = vadd.f32 %v262, %v349
  %v351 = vand.u32 %v40, 4294901760
  %v352 = vsub.f32 %v40, %v351
  %353 = vmatmul.f32.gmra.mxu0 %v352
  %v354 = vpop.f32.mrf.mxu0
  %v355 = vadd.f32 %v266, %v354
  %v356 = vand.u32 %v43, 4294901760
  %v357 = vsub.f32 %v43, %v356
  %358 = vmatmul.f32.gmra.mxu0 %v357
  %v359 = vpop.f32.mrf.mxu0
  %v360 = vadd.f32 %v270, %v359
  %v361 = vand.u32 %v46, 4294901760
  %v362 = vsub.f32 %v46, %v361
  %363 = vmatmul.f32.gmra.mxu0 %v362
  %v364 = vpop.f32.mrf.mxu0
  %v365 = vadd.f32 %v274, %v364
  %v366 = vand.u32 %v49, 4294901760
  %v367 = vsub.f32 %v49, %v366
  %368 = vmatmul.f32.gmra.mxu0 %v367
  %v369 = vpop.f32.mrf.mxu0
  %v370 = vadd.f32 %v278, %v369
  %v371 = vand.u32 %v52, 4294901760
  %v372 = vsub.f32 %v52, %v371
  %373 = vmatmul.f32.gmra.mxu0 %v372
  %v374 = vpop.f32.mrf.mxu0
  %v375 = vadd.f32 %v282, %v374
  %v376 = vand.u32 %v55, 4294901760
  %v377 = vsub.f32 %v55, %v376
  %378 = vmatmul.f32.gmra.mxu0 %v377
  %v379 = vpop.f32.mrf.mxu0
  %v380 = vadd.f32 %v286, %v379
  %v381 = vand.u32 %v58, 4294901760
  %v382 = vsub.f32 %v58, %v381
  %383 = vmatmul.f32.gmra.mxu0 %v382
  %v384 = vpop.f32.mrf.mxu0
  %v385 = vadd.f32 %v290, %v384
  %v386 = vand.u32 %v61, 4294901760
  %v387 = vsub.f32 %v61, %v386
  %388 = vmatmul.f32.gmra.mxu0 %v387
  %v389 = vpop.f32.mrf.mxu0
  %v390 = vadd.f32 %v294, %v389
  %v391 = vand.u32 %v64, 4294901760
  %v392 = vsub.f32 %v64, %v391
  %393 = vmatmul.f32.gmra.mxu0 %v392
  %v394 = vpop.f32.mrf.mxu0
  %v395 = vadd.f32 %v298, %v394
  %v396 = vand.u32 %v67, 4294901760
  %v397 = vsub.f32 %v67, %v396
  %398 = vmatmul.f32.gmra.mxu0 %v397
  %v399 = vpop.f32.mrf.mxu0
  %v400 = vadd.f32 %v302, %v399
  %v401 = vand.u32 %v70, 4294901760
  %v402 = vsub.f32 %v70, %v401
  %403 = vmatmul.f32.gmra.mxu0 %v402
  %v404 = vpop.f32.mrf.mxu0
  %v405 = vadd.f32 %v306, %v404
  %v406 = vand.u32 %v73, 4294901760
  %v407 = vsub.f32 %v73, %v406
  %408 = vmatmul.f32.gmra.mxu0 %v407
  %v409 = vpop.f32.mrf.mxu0
  %v410 = vadd.f32 %v310, %v409
  %v411 = vand.u32 %v76, 4294901760
  %v412 = vsub.f32 %v76, %v411
  %413 = vmatmul.f32.gmra.mxu0 %v412
  %v414 = vpop.f32.mrf.mxu0
  %v415 = vadd.f32 %v314, %v414
  %416 = vdwg.mxu0
  %417 = vmatpush.msra.mxu0 0.0
  %418 = vmatpush.msra.mxu0 0.0
  %419 = vmatpush.msra.mxu0 0.0
  %420 = vmatpush.msra.mxu0 0.0
  %421 = vmatpush.msra.mxu0 0.0
  %422 = vmatpush.msra.mxu0 0.0
  %423 = vmatpush.msra.mxu0 0.0
  %424 = vmatpush.msra.mxu0 0.0
  %425 = vmatpush.msra.mxu0 0.0
  %426 = vmatpush.msra.mxu0 0.0
  %427 = vmatpush.msra.mxu0 0.0
  %428 = vmatpush.msra.mxu0 0.0
  %429 = vmatpush.msra.mxu0 0.0
  %430 = vmatpush.msra.mxu0 0.0
  %v431 = vand.u32 %v28, 4294901760
  %432 = vmatpush.msra.mxu0 %v431
  %v433 = vand.u32 %v27, 4294901760
  %434 = vmatpush.msra.mxu0 %v433
  %v435 = vand.u32 %v31, 4294901760
  %v436 = vsub.f32 %v31, %v435
  %v437 = vand.u32 %v436, 4294901760
  %438 = vmatmul.f32.gmra.mxu0 %v437
  %v439 = vpop.f32.mrf.mxu0
  %v440 = vadd.f32 %v340, %v439
  %v441 = vand.u32 %v34, 4294901760
  %v442 = vsub.f32 %v34, %v441
  %v443 = vand.u32 %v442, 4294901760
  %444 = vmatmul.f32.gmra.mxu0 %v443
  %v445 = vpop.f32.mrf.mxu0
  %v446 = vadd.f32 %v345, %v445
  %v447 = vand.u32 %v37, 4294901760
  %v448 = vsub.f32 %v37, %v447
  %v449 = vand.u32 %v448, 4294901760
  %450 = vmatmul.f32.gmra.mxu0 %v449
  %v451 = vpop.f32.mrf.mxu0
  %v452 = vadd.f32 %v350, %v451
  %v453 = vand.u32 %v40, 4294901760
  %v454 = vsub.f32 %v40, %v453
  %v455 = vand.u32 %v454, 4294901760
  %456 = vmatmul.f32.gmra.mxu0 %v455
  %v457 = vpop.f32.mrf.mxu0
  %v458 = vadd.f32 %v355, %v457
  %v459 = vand.u32 %v43, 4294901760
  %v460 = vsub.f32 %v43, %v459
  %v461 = vand.u32 %v460, 4294901760
  %462 = vmatmul.f32.gmra.mxu0 %v461
  %v463 = vpop.f32.mrf.mxu0
  %v464 = vadd.f32 %v360, %v463
  %v465 = vand.u32 %v46, 4294901760
  %v466 = vsub.f32 %v46, %v465
  %v467 = vand.u32 %v466, 4294901760
  %468 = vmatmul.f32.gmra.mxu0 %v467
  %v469 = vpop.f32.mrf.mxu0
  %v470 = vadd.f32 %v365, %v469
  %v471 = vand.u32 %v49, 4294901760
  %v472 = vsub.f32 %v49, %v471
  %v473 = vand.u32 %v472, 4294901760
  %474 = vmatmul.f32.gmra.mxu0 %v473
  %v475 = vpop.f32.mrf.mxu0
  %v476 = vadd.f32 %v370, %v475
  %v477 = vand.u32 %v52, 4294901760
  %v478 = vsub.f32 %v52, %v477
  %v479 = vand.u32 %v478, 4294901760
  %480 = vmatmul.f32.gmra.mxu0 %v479
  %v481 = vpop.f32.mrf.mxu0
  %v482 = vadd.f32 %v375, %v481
  %v483 = vand.u32 %v55, 4294901760
  %v484 = vsub.f32 %v55, %v483
  %v485 = vand.u32 %v484, 4294901760
  %486 = vmatmul.f32.gmra.mxu0 %v485
  %v487 = vpop.f32.mrf.mxu0
  %v488 = vadd.f32 %v380, %v487
  %v489 = vand.u32 %v58, 4294901760
  %v490 = vsub.f32 %v58, %v489
  %v491 = vand.u32 %v490, 4294901760
  %492 = vmatmul.f32.gmra.mxu0 %v491
  %v493 = vpop.f32.mrf.mxu0
  %v494 = vadd.f32 %v385, %v493
  %v495 = vand.u32 %v61, 4294901760
  %v496 = vsub.f32 %v61, %v495
  %v497 = vand.u32 %v496, 4294901760
  %498 = vmatmul.f32.gmra.mxu0 %v497
  %v499 = vpop.f32.mrf.mxu0
  %v500 = vadd.f32 %v390, %v499
  %v501 = vand.u32 %v64, 4294901760
  %v502 = vsub.f32 %v64, %v501
  %v503 = vand.u32 %v502, 4294901760
  %504 = vmatmul.f32.gmra.mxu0 %v503
  %v505 = vpop.f32.mrf.mxu0
  %v506 = vadd.f32 %v395, %v505
  %v507 = vand.u32 %v67, 4294901760
  %v508 = vsub.f32 %v67, %v507
  %v509 = vand.u32 %v508, 4294901760
  %510 = vmatmul.f32.gmra.mxu0 %v509
  %v511 = vpop.f32.mrf.mxu0
  %v512 = vadd.f32 %v400, %v511
  %v513 = vand.u32 %v70, 4294901760
  %v514 = vsub.f32 %v70, %v513
  %v515 = vand.u32 %v514, 4294901760
  %516 = vmatmul.f32.gmra.mxu0 %v515
  %v517 = vpop.f32.mrf.mxu0
  %v518 = vadd.f32 %v405, %v517
  %v519 = vand.u32 %v73, 4294901760
  %v520 = vsub.f32 %v73, %v519
  %v521 = vand.u32 %v520, 4294901760
  %522 = vmatmul.f32.gmra.mxu0 %v521
  %v523 = vpop.f32.mrf.mxu0
  %v524 = vadd.f32 %v410, %v523
  %v525 = vand.u32 %v76, 4294901760
  %v526 = vsub.f32 %v76, %v525
  %v527 = vand.u32 %v526, 4294901760
  %528 = vmatmul.f32.gmra.mxu0 %v527
  %v529 = vpop.f32.mrf.mxu0
  %v530 = vadd.f32 %v415, %v529
  %531 = vdwg.mxu0
  %532 = vmatpush.msra.mxu0 0.0
  %533 = vmatpush.msra.mxu0 0.0
  %534 = vmatpush.msra.mxu0 0.0
  %535 = vmatpush.msra.mxu0 0.0
  %536 = vmatpush.msra.mxu0 0.0
  %537 = vmatpush.msra.mxu0 0.0
  %538 = vmatpush.msra.mxu0 0.0
  %539 = vmatpush.msra.mxu0 0.0
  %540 = vmatpush.msra.mxu0 0.0
  %541 = vmatpush.msra.mxu0 0.0
  %542 = vmatpush.msra.mxu0 0.0
  %543 = vmatpush.msra.mxu0 0.0
  %544 = vmatpush.msra.mxu0 0.0
  %545 = vmatpush.msra.mxu0 0.0
  %v546 = vand.u32 %v28, 4294901760
  %v547 = vsub.f32 %v28, %v546
  %v548 = vand.u32 %v547, 4294901760
  %549 = vmatpush.msra.mxu0 %v548
  %v550 = vand.u32 %v27, 4294901760
  %v551 = vsub.f32 %v27, %v550
  %v552 = vand.u32 %v551, 4294901760
  %553 = vmatpush.msra.mxu0 %v552
  %v554 = vand.u32 %v31, 4294901760
  %555 = vmatmul.f32.gmra.mxu0 %v554
  %v556 = vpop.f32.mrf.mxu0
  %v557 = vadd.f32 %v440, %v556
  %v558 = vand.u32 %v34, 4294901760
  %559 = vmatmul.f32.gmra.mxu0 %v558
  %v560 = vpop.f32.mrf.mxu0
  %v561 = vadd.f32 %v446, %v560
  %v562 = vand.u32 %v37, 4294901760
  %563 = vmatmul.f32.gmra.mxu0 %v562
  %v564 = vpop.f32.mrf.mxu0
  %v565 = vadd.f32 %v452, %v564
  %v566 = vand.u32 %v40, 4294901760
  %567 = vmatmul.f32.gmra.mxu0 %v566
  %v568 = vpop.f32.mrf.mxu0
  %v569 = vadd.f32 %v458, %v568
  %v570 = vand.u32 %v43, 4294901760
  %571 = vmatmul.f32.gmra.mxu0 %v570
  %v572 = vpop.f32.mrf.mxu0
  %v573 = vadd.f32 %v464, %v572
  %v574 = vand.u32 %v46, 4294901760
  %575 = vmatmul.f32.gmra.mxu0 %v574
  %v576 = vpop.f32.mrf.mxu0
  %v577 = vadd.f32 %v470, %v576
  %v578 = vand.u32 %v49, 4294901760
  %579 = vmatmul.f32.gmra.mxu0 %v578
  %v580 = vpop.f32.mrf.mxu0
  %v581 = vadd.f32 %v476, %v580
  %v582 = vand.u32 %v52, 4294901760
  %583 = vmatmul.f32.gmra.mxu0 %v582
  %v584 = vpop.f32.mrf.mxu0
  %v585 = vadd.f32 %v482, %v584
  %v586 = vand.u32 %v55, 4294901760
  %587 = vmatmul.f32.gmra.mxu0 %v586
  %v588 = vpop.f32.mrf.mxu0
  %v589 = vadd.f32 %v488, %v588
  %v590 = vand.u32 %v58, 4294901760
  %591 = vmatmul.f32.gmra.mxu0 %v590
  %v592 = vpop.f32.mrf.mxu0
  %v593 = vadd.f32 %v494, %v592
  %v594 = vand.u32 %v61, 4294901760
  %595 = vmatmul.f32.gmra.mxu0 %v594
  %v596 = vpop.f32.mrf.mxu0
  %v597 = vadd.f32 %v500, %v596
  %v598 = vand.u32 %v64, 4294901760
  %599 = vmatmul.f32.gmra.mxu0 %v598
  %v600 = vpop.f32.mrf.mxu0
  %v601 = vadd.f32 %v506, %v600
  %v602 = vand.u32 %v67, 4294901760
  %603 = vmatmul.f32.gmra.mxu0 %v602
  %v604 = vpop.f32.mrf.mxu0
  %v605 = vadd.f32 %v512, %v604
  %v606 = vand.u32 %v70, 4294901760
  %607 = vmatmul.f32.gmra.mxu0 %v606
  %v608 = vpop.f32.mrf.mxu0
  %v609 = vadd.f32 %v518, %v608
  %v610 = vand.u32 %v73, 4294901760
  %611 = vmatmul.f32.gmra.mxu0 %v610
  %v612 = vpop.f32.mrf.mxu0
  %v613 = vadd.f32 %v524, %v612
  %v614 = vand.u32 %v76, 4294901760
  %615 = vmatmul.f32.gmra.mxu0 %v614
  %v616 = vpop.f32.mrf.mxu0
  %v617 = vadd.f32 %v530, %v616
  %618 = vdwg.mxu0
  %619 = vmatpush.msra.mxu0 0.0
  %620 = vmatpush.msra.mxu0 0.0
  %621 = vmatpush.msra.mxu0 0.0
  %622 = vmatpush.msra.mxu0 0.0
  %623 = vmatpush.msra.mxu0 0.0
  %624 = vmatpush.msra.mxu0 0.0
  %625 = vmatpush.msra.mxu0 0.0
  %626 = vmatpush.msra.mxu0 0.0
  %627 = vmatpush.msra.mxu0 0.0
  %628 = vmatpush.msra.mxu0 0.0
  %629 = vmatpush.msra.mxu0 0.0
  %630 = vmatpush.msra.mxu0 0.0
  %631 = vmatpush.msra.mxu0 0.0
  %632 = vmatpush.msra.mxu0 0.0
  %v633 = vand.u32 %v28, 4294901760
  %634 = vmatpush.msra.mxu0 %v633
  %v635 = vand.u32 %v27, 4294901760
  %636 = vmatpush.msra.mxu0 %v635
  %v637 = vand.u32 %v31, 4294901760
  %638 = vmatmul.f32.gmra.mxu0 %v637
  %v639 = vpop.f32.mrf.mxu0
  %v640 = vadd.f32 %v557, %v639
  %v641 = vand.u32 %v34, 4294901760
  %642 = vmatmul.f32.gmra.mxu0 %v641
  %v643 = vpop.f32.mrf.mxu0
  %v644 = vadd.f32 %v561, %v643
  %v645 = vand.u32 %v37, 4294901760
  %646 = vmatmul.f32.gmra.mxu0 %v645
  %v647 = vpop.f32.mrf.mxu0
  %v648 = vadd.f32 %v565, %v647
  %v649 = vand.u32 %v40, 4294901760
  %650 = vmatmul.f32.gmra.mxu0 %v649
  %v651 = vpop.f32.mrf.mxu0
  %v652 = vadd.f32 %v569, %v651
  %v653 = vand.u32 %v43, 4294901760
  %654 = vmatmul.f32.gmra.mxu0 %v653
  %v655 = vpop.f32.mrf.mxu0
  %v656 = vadd.f32 %v573, %v655
  %v657 = vand.u32 %v46, 4294901760
  %658 = vmatmul.f32.gmra.mxu0 %v657
  %v659 = vpop.f32.mrf.mxu0
  %v660 = vadd.f32 %v577, %v659
  %v661 = vand.u32 %v49, 4294901760
  %662 = vmatmul.f32.gmra.mxu0 %v661
  %v663 = vpop.f32.mrf.mxu0
  %v664 = vadd.f32 %v581, %v663
  %v665 = vand.u32 %v52, 4294901760
  %666 = vmatmul.f32.gmra.mxu0 %v665
  %v667 = vpop.f32.mrf.mxu0
  %v668 = vadd.f32 %v585, %v667
  %v669 = vand.u32 %v55, 4294901760
  %670 = vmatmul.f32.gmra.mxu0 %v669
  %v671 = vpop.f32.mrf.mxu0
  %v672 = vadd.f32 %v589, %v671
  %v673 = vand.u32 %v58, 4294901760
  %674 = vmatmul.f32.gmra.mxu0 %v673
  %v675 = vpop.f32.mrf.mxu0
  %v676 = vadd.f32 %v593, %v675
  %v677 = vand.u32 %v61, 4294901760
  %678 = vmatmul.f32.gmra.mxu0 %v677
  %v679 = vpop.f32.mrf.mxu0
  %v680 = vadd.f32 %v597, %v679
  %v681 = vand.u32 %v64, 4294901760
  %682 = vmatmul.f32.gmra.mxu0 %v681
  %v683 = vpop.f32.mrf.mxu0
  %v684 = vadd.f32 %v601, %v683
  %v685 = vand.u32 %v67, 4294901760
  %686 = vmatmul.f32.gmra.mxu0 %v685
  %v687 = vpop.f32.mrf.mxu0
  %v688 = vadd.f32 %v605, %v687
  %v689 = vand.u32 %v70, 4294901760
  %690 = vmatmul.f32.gmra.mxu0 %v689
  %v691 = vpop.f32.mrf.mxu0
  %v692 = vadd.f32 %v609, %v691
  %v693 = vand.u32 %v73, 4294901760
  %694 = vmatmul.f32.gmra.mxu0 %v693
  %v695 = vpop.f32.mrf.mxu0
  %v696 = vadd.f32 %v613, %v695
  %v697 = vand.u32 %v76, 4294901760
  %698 = vmatmul.f32.gmra.mxu0 %v697
  %v699 = vpop.f32.mrf.mxu0
  %v700 = vadd.f32 %v617, %v699
  %701 = vdwg.mxu0
  %vm702 = vcmask 523264
  %703 = vst.msk [vmem:[%s2] sm:$0xff] %vm702, %v640
  %704 = vst.msk [vmem:[%s2 + $0x8] sm:$0xff] %vm702, %v644
  %705 = vst.msk [vmem:[%s2 + $0x10] sm:$0xff] %vm702, %v648
  %706 = vst.msk [vmem:[%s2 + $0x18] sm:$0xff] %vm702, %v652
  %707 = vst.msk [vmem:[%s2 + $0x20] sm:$0xff] %vm702, %v656
  %708 = vst.msk [vmem:[%s2 + $0x28] sm:$0xff] %vm702, %v660
  %709 = vst.msk [vmem:[%s2 + $0x30] sm:$0xff] %vm702, %v664
  %710 = vst.msk [vmem:[%s2 + $0x38] sm:$0xff] %vm702, %v668
  %711 = vst.msk [vmem:[%s2 + $0x40] sm:$0xff] %vm702, %v672
  %712 = vst.msk [vmem:[%s2 + $0x48] sm:$0xff] %vm702, %v676
  %713 = vst.msk [vmem:[%s2 + $0x50] sm:$0xff] %vm702, %v680
  %714 = vst.msk [vmem:[%s2 + $0x58] sm:$0xff] %vm702, %v684
  %715 = vst.msk [vmem:[%s2 + $0x60] sm:$0xff] %vm702, %v688
  %716 = vst.msk [vmem:[%s2 + $0x68] sm:$0xff] %vm702, %v692
  %717 = vst.msk [vmem:[%s2 + $0x70] sm:$0xff] %vm702, %v696
  %718 = vst.msk [vmem:[%s2 + $0x78] sm:$0xff] %vm702, %v700
  // Predicated region
  $region10: #{tpu_custom_call.1} parent=0 // pred_check
    _
  $region11: #{tpu_custom_call.1} parent=0 // pred_check_branch
    %720 = sbr.rel (0) target = $region13
  $region12: #{tpu_custom_call.1} parent=0 // pred_region
    _
  $region13: #{tpu_custom_call.1} parent=0 // pred_fallthru
    _
  // Predicated region
  $region14: #{tpu_custom_call.1} parent=0 // pred_check
    _
  $region15: #{tpu_custom_call.1} parent=0 // pred_check_branch
    %722 = sbr.rel (0) target = $region17
  $region16: #{tpu_custom_call.1} parent=0 // pred_region
    _
  $region17: #{tpu_custom_call.1} parent=0 // pred_fallthru
    _

</llo_original>
